<compile_context>
chip_gen: v7x
topology: tpu7x:2x2x1
jax: 0.10.0
libtpu: 0.0.40
codegen_flags: <defaults>
</compile_context>

<pallas_src>
import functools

import jax
import jax.numpy as jnp
from jax.experimental import pallas as pl
from jax.experimental.pallas import tpu as pltpu


def _deepset_kernel(x_ref, w1_ref, b1_ref, w2_ref, b2_ref, w3_ref, b3_ref,
                    wr_ref, br_ref, out_ref, *, bb, n):
    # x_ref block: [bb*n, D] rows (bb sets of n elements each), compute dtype.
    x = x_ref[...]

    # phi MLP: low-precision operands on the MXU, f32 accumulation + f32 bias.
    h = jnp.dot(x, w1_ref[...], preferred_element_type=jnp.float32) + b1_ref[...]
    h = jnp.maximum(h, 0.0).astype(x.dtype)                        # [bb*n, 32]
    h = jnp.dot(h, w2_ref[...], preferred_element_type=jnp.float32) + b2_ref[...]
    h = jnp.maximum(h, 0.0).astype(x.dtype)                        # [bb*n, 64]
    f = jnp.dot(h, w3_ref[...], preferred_element_type=jnp.float32) + b3_ref[...]
    # f: [bb*n, R] in f32.

    # Exact f32 set reduction. The reshape only splits the row (sublane) axis;
    # the lane axis (R) is untouched.
    s = f.reshape(bb, n, f.shape[-1]).sum(axis=1)                  # [bb, R] f32

    # rho: Linear(R, R); dense (bb, R) store per grid step.
    y = jnp.dot(s.astype(wr_ref.dtype), wr_ref[...],
                preferred_element_type=jnp.float32) + br_ref[...]
    out_ref[...] = y.astype(out_ref.dtype)


def _choose_block_batch(B, N, target_rows=1024):
    """Number of sets per grid step (bb). bb*N rows feed each phi matmul."""
    if B <= 8 or B * N <= target_rows:
        return B                        # whole batch per step; block == full dims
    bb = max(8, (target_rows // max(N, 1)) // 8 * 8)   # multiple of 8 sublanes
    padded_b = ((B + 7) // 8) * 8
    return min(bb, padded_b)


def deepset_forward(x, params, *, compute_dtype=jnp.bfloat16, target_rows=1024):
    """x: [B, N, D] float32 -> [B, R] float32."""
    B, N, D = x.shape
    w1, b1, w2, b2, w3, b3, wr, br = params
    R = wr.shape[1]

    bb = _choose_block_batch(B, N, target_rows)
    Bp = ((B + bb - 1) // bb) * bb
    if Bp != B:
        # Padded sets only affect output rows >= B, which are sliced off below.
        x = jnp.pad(x, ((0, Bp - B), (0, 0), (0, 0)))

    # bf16 (or requested dtype) matmul operands; biases stay f32; all matmuls
    # accumulate in f32 inside the kernel.
    x2d = x.astype(compute_dtype).reshape(Bp * N, D)
    w1, w2, w3, wr = (w.astype(compute_dtype) for w in (w1, w2, w3, wr))
    b1, b2, b3, br = (b.astype(jnp.float32) for b in (b1, b2, b3, br))

    rows = bb * N
    grid = (Bp // bb,)

    const = lambda arr: pl.BlockSpec(arr.shape, lambda i: (0,) * arr.ndim)
    kernel = functools.partial(_deepset_kernel, bb=bb, n=N)

    out = pl.pallas_call(
        kernel,
        out_shape=jax.ShapeDtypeStruct((Bp, R), jnp.float32),
        grid_spec=pltpu.PrefetchScalarGridSpec(
            num_scalar_prefetch=0,
            grid=grid,
            in_specs=[
                pl.BlockSpec((rows, D), lambda i: (i, 0)),   # bb sets per step
                const(w1), const(b1),
                const(w2), const(b2),
                const(w3), const(b3),
                const(wr), const(br),
            ],
            out_specs=pl.BlockSpec((bb, R), lambda i: (i, 0)),
        ),
        compiler_params=pltpu.CompilerParams(
            dimension_semantics=("parallel",),
            vmem_limit_bytes=64 * 1024 * 1024,
        ),
    )(x2d, w1, b1, w2, b2, w3, b3, wr, br)

    return out[:B]


def init_params(key, input_size, representation_size):
    """Deterministic synthetic parameters (shapes match the PyTorch module)."""
    D, R = input_size, representation_size
    dims = [(D, 32), (32, 64), (64, R), (R, R)]
    keys = jax.random.split(key, 2 * len(dims))
    params = []
    for i, (fan_in, fan_out) in enumerate(dims):
        bound = 1.0 / jnp.sqrt(fan_in)
        w = jax.random.uniform(keys[2 * i], (fan_in, fan_out),
                               minval=-bound, maxval=bound, dtype=jnp.float32)
        b = jax.random.uniform(keys[2 * i + 1], (1, fan_out),
                               minval=-bound, maxval=bound, dtype=jnp.float32)
        params.extend([w, b])
    return tuple(params)


def deepset_reference(x, params, compute_dtype=jnp.float32):
    """Pure-JAX reference of the PyTorch forward pass.

    With compute_dtype=bf16 it mirrors the kernel's mixed-precision scheme
    (bf16 matmul operands, f32 accumulation / bias / set-sum).
    """
    w1, b1, w2, b2, w3, b3, wr, br = params
    cd, f32 = compute_dtype, jnp.float32
    h = jnp.dot(x.astype(cd), w1.astype(cd), preferred_element_type=f32) + b1
    h = jnp.maximum(h, 0.0).astype(cd)
    h = jnp.dot(h, w2.astype(cd), preferred_element_type=f32) + b2
    h = jnp.maximum(h, 0.0).astype(cd)
    f = jnp.dot(h, w3.astype(cd), preferred_element_type=f32) + b3
    s = f.sum(axis=1)
    return jnp.dot(s.astype(cd), wr.astype(cd), preferred_element_type=f32) + br


if __name__ == "__main__":
    B, N, D, R = 8, 8, 4, 16   # batch, set size, input_size, representation_size

    key = jax.random.PRNGKey(0)
    kx, kp = jax.random.split(key)
    x = jax.random.normal(kx, (B, N, D), dtype=jnp.float32)
    params = init_params(kp, D, R)

    out = jax.block_until_ready(deepset_forward(x, params))
    assert out.shape == (B, R)
    assert jnp.all(jnp.isfinite(out))

    # Tight check against a precision-matched (bf16 operand / f32 accum) reference.
    ref_mixed = deepset_reference(x, params, compute_dtype=jnp.bfloat16)
    assert jnp.allclose(out, ref_mixed, atol=2e-3, rtol=2e-3), (
        f"max abs err vs mixed-precision ref = {jnp.max(jnp.abs(out - ref_mixed))}")

    # Loose check against the full-f32 module semantics (bf16 rounding only).
    ref_f32 = deepset_reference(x, params)
    assert jnp.allclose(out, ref_f32, atol=2e-1, rtol=5e-2), (
        f"max abs err vs f32 ref = {jnp.max(jnp.abs(out - ref_f32))}")

    print("KERNEL_OK")
</pallas_src>

<mosaic_0001>
module attributes {stable_mosaic.version = 11 : i64} {
  func.func @_deepset_kernel(%arg0: i32, %arg1: memref<64x4xbf16, #tpu.memory_space<vmem>>, %arg2: memref<4x32xbf16, #tpu.memory_space<vmem>>, %arg3: memref<1x32xf32, #tpu.memory_space<vmem>>, %arg4: memref<32x64xbf16, #tpu.memory_space<vmem>>, %arg5: memref<1x64xf32, #tpu.memory_space<vmem>>, %arg6: memref<64x16xbf16, #tpu.memory_space<vmem>>, %arg7: memref<1x16xf32, #tpu.memory_space<vmem>>, %arg8: memref<16x16xbf16, #tpu.memory_space<vmem>>, %arg9: memref<1x16xf32, #tpu.memory_space<vmem>>, %arg10: memref<8x16xf32, #tpu.memory_space<vmem>>) attributes {dimension_semantics = [#tpu.dimension_semantics<parallel>], iteration_bounds = array<i64: 1>, scalar_prefetch = 0 : i64, scratch_operands = 0 : i64, tpu.core_type = #tpu.core_type<tc>, window_params = [{transform_indices = @transform_0, window_bounds = array<i64: 64, 4>}, {pipeline_mode = #tpu.pipeline_mode<synchronous>, transform_indices = @transform_1, window_bounds = array<i64: 4, 32>}, {pipeline_mode = #tpu.pipeline_mode<synchronous>, transform_indices = @transform_2, window_bounds = array<i64: 1, 32>}, {pipeline_mode = #tpu.pipeline_mode<synchronous>, transform_indices = @transform_3, window_bounds = array<i64: 32, 64>}, {pipeline_mode = #tpu.pipeline_mode<synchronous>, transform_indices = @transform_4, window_bounds = array<i64: 1, 64>}, {pipeline_mode = #tpu.pipeline_mode<synchronous>, transform_indices = @transform_5, window_bounds = array<i64: 64, 16>}, {pipeline_mode = #tpu.pipeline_mode<synchronous>, transform_indices = @transform_6, window_bounds = array<i64: 1, 16>}, {pipeline_mode = #tpu.pipeline_mode<synchronous>, transform_indices = @transform_7, window_bounds = array<i64: 16, 16>}, {pipeline_mode = #tpu.pipeline_mode<synchronous>, transform_indices = @transform_8, window_bounds = array<i64: 1, 16>}, {transform_indices = @transform_9, window_bounds = array<i64: 8, 16>}]} {
    %c0 = arith.constant 0 : index
    %c0_0 = arith.constant 0 : index
    %0 = vector.load %arg1[%c0, %c0_0] : memref<64x4xbf16, #tpu.memory_space<vmem>>, vector<64x4xbf16>
    %c0_1 = arith.constant 0 : index
    %c0_2 = arith.constant 0 : index
    %1 = vector.load %arg2[%c0_1, %c0_2] : memref<4x32xbf16, #tpu.memory_space<vmem>>, vector<4x32xbf16>
    %cst = arith.constant dense<0.000000e+00> : vector<64x32xf32>
    %2 = tpu.matmul %0, %1, %cst {dimension_numbers = #tpu.dot_dimension_numbers<[1], [0], [0], [1], [0, 0, 1, 1], [], []>} : vector<64x4xbf16>, vector<4x32xbf16>, vector<64x32xf32> -> vector<64x32xf32>
    %c0_3 = arith.constant 0 : index
    %c0_4 = arith.constant 0 : index
    %3 = vector.load %arg3[%c0_3, %c0_4] : memref<1x32xf32, #tpu.memory_space<vmem>>, vector<1x32xf32>
    %4 = vector.broadcast %3 : vector<1x32xf32> to vector<64x32xf32>
    %5 = arith.addf %2, %4 : vector<64x32xf32>
    %cst_5 = arith.constant 0.000000e+00 : f32
    %6 = vector.broadcast %cst_5 : f32 to vector<64x32xf32>
    %7 = arith.maximumf %5, %6 : vector<64x32xf32>
    %8 = arith.truncf %7 : vector<64x32xf32> to vector<64x32xbf16>
    %c0_6 = arith.constant 0 : index
    %c0_7 = arith.constant 0 : index
    %9 = vector.load %arg4[%c0_6, %c0_7] : memref<32x64xbf16, #tpu.memory_space<vmem>>, vector<32x64xbf16>
    %cst_8 = arith.constant dense<0.000000e+00> : vector<64x64xf32>
    %10 = tpu.matmul %8, %9, %cst_8 {dimension_numbers = #tpu.dot_dimension_numbers<[1], [0], [0], [1], [0, 0, 1, 1], [], []>} : vector<64x32xbf16>, vector<32x64xbf16>, vector<64x64xf32> -> vector<64x64xf32>
    %c0_9 = arith.constant 0 : index
    %c0_10 = arith.constant 0 : index
    %11 = vector.load %arg5[%c0_9, %c0_10] : memref<1x64xf32, #tpu.memory_space<vmem>>, vector<1x64xf32>
    %12 = vector.broadcast %11 : vector<1x64xf32> to vector<64x64xf32>
    %13 = arith.addf %10, %12 : vector<64x64xf32>
    %cst_11 = arith.constant 0.000000e+00 : f32
    %14 = vector.broadcast %cst_11 : f32 to vector<64x64xf32>
    %15 = arith.maximumf %13, %14 : vector<64x64xf32>
    %16 = arith.truncf %15 : vector<64x64xf32> to vector<64x64xbf16>
    %c0_12 = arith.constant 0 : index
    %c0_13 = arith.constant 0 : index
    %17 = vector.load %arg6[%c0_12, %c0_13] : memref<64x16xbf16, #tpu.memory_space<vmem>>, vector<64x16xbf16>
    %cst_14 = arith.constant dense<0.000000e+00> : vector<64x16xf32>
    %18 = tpu.matmul %16, %17, %cst_14 {dimension_numbers = #tpu.dot_dimension_numbers<[1], [0], [0], [1], [0, 0, 1, 1], [], []>} : vector<64x64xbf16>, vector<64x16xbf16>, vector<64x16xf32> -> vector<64x16xf32>
    %c0_15 = arith.constant 0 : index
    %c0_16 = arith.constant 0 : index
    %19 = vector.load %arg7[%c0_15, %c0_16] : memref<1x16xf32, #tpu.memory_space<vmem>>, vector<1x16xf32>
    %20 = vector.broadcast %19 : vector<1x16xf32> to vector<64x16xf32>
    %21 = arith.addf %18, %20 : vector<64x16xf32>
    %22 = vector.shape_cast %21 : vector<64x16xf32> to vector<8x8x16xf32>
    %cst_17 = arith.constant dense<0.000000e+00> : vector<8x16xf32>
    %23 = vector.multi_reduction <add>, %22, %cst_17 [1] : vector<8x8x16xf32> to vector<8x16xf32>
    %24 = arith.truncf %23 : vector<8x16xf32> to vector<8x16xbf16>
    %c0_18 = arith.constant 0 : index
    %c0_19 = arith.constant 0 : index
    %25 = vector.load %arg8[%c0_18, %c0_19] : memref<16x16xbf16, #tpu.memory_space<vmem>>, vector<16x16xbf16>
    %cst_20 = arith.constant dense<0.000000e+00> : vector<8x16xf32>
    %26 = tpu.matmul %24, %25, %cst_20 {dimension_numbers = #tpu.dot_dimension_numbers<[1], [0], [0], [1], [0, 0, 1, 1], [], []>} : vector<8x16xbf16>, vector<16x16xbf16>, vector<8x16xf32> -> vector<8x16xf32>
    %c0_21 = arith.constant 0 : index
    %c0_22 = arith.constant 0 : index
    %27 = vector.load %arg9[%c0_21, %c0_22] : memref<1x16xf32, #tpu.memory_space<vmem>>, vector<1x16xf32>
    %28 = vector.broadcast %27 : vector<1x16xf32> to vector<8x16xf32>
    %29 = arith.addf %26, %28 : vector<8x16xf32>
    %c0_23 = arith.constant 0 : index
    %c0_24 = arith.constant 0 : index
    %30 = vector.load %arg10[%c0_23, %c0_24] : memref<8x16xf32, #tpu.memory_space<vmem>>, vector<8x16xf32>
    tpu.vector_store %arg10[%c0_23, %c0_24], %29 {strides = array<i32>} : memref<8x16xf32, #tpu.memory_space<vmem>>, vector<8x16xf32>,
    return
  }
  func.func @transform_0(%arg0: i32) -> (i32, i32) {
    %c0_i32 = arith.constant 0 : i32
    %c0_i32_0 = arith.constant 0 : i32
    return %arg0, %c0_i32 : i32, i32
  }
  func.func @transform_1(%arg0: i32) -> (i32, i32) {
    %c0_i32 = arith.constant 0 : i32
    %c0_i32_0 = arith.constant 0 : i32
    %c0_i32_1 = arith.constant 0 : i32
    return %c0_i32, %c0_i32_0 : i32, i32
  }
  func.func @transform_2(%arg0: i32) -> (i32, i32) {
    %c0_i32 = arith.constant 0 : i32
    %c0_i32_0 = arith.constant 0 : i32
    %c0_i32_1 = arith.constant 0 : i32
    return %c0_i32, %c0_i32_0 : i32, i32
  }
  func.func @transform_3(%arg0: i32) -> (i32, i32) {
    %c0_i32 = arith.constant 0 : i32
    %c0_i32_0 = arith.constant 0 : i32
    %c0_i32_1 = arith.constant 0 : i32
    return %c0_i32, %c0_i32_0 : i32, i32
  }
  func.func @transform_4(%arg0: i32) -> (i32, i32) {
    %c0_i32 = arith.constant 0 : i32
    %c0_i32_0 = arith.constant 0 : i32
    %c0_i32_1 = arith.constant 0 : i32
    return %c0_i32, %c0_i32_0 : i32, i32
  }
  func.func @transform_5(%arg0: i32) -> (i32, i32) {
    %c0_i32 = arith.constant 0 : i32
    %c0_i32_0 = arith.constant 0 : i32
    %c0_i32_1 = arith.constant 0 : i32
    return %c0_i32, %c0_i32_0 : i32, i32
  }
  func.func @transform_6(%arg0: i32) -> (i32, i32) {
    %c0_i32 = arith.constant 0 : i32
    %c0_i32_0 = arith.constant 0 : i32
    %c0_i32_1 = arith.constant 0 : i32
    return %c0_i32, %c0_i32_0 : i32, i32
  }
  func.func @transform_7(%arg0: i32) -> (i32, i32) {
    %c0_i32 = arith.constant 0 : i32
    %c0_i32_0 = arith.constant 0 : i32
    %c0_i32_1 = arith.constant 0 : i32
    return %c0_i32, %c0_i32_0 : i32, i32
  }
  func.func @transform_8(%arg0: i32) -> (i32, i32) {
    %c0_i32 = arith.constant 0 : i32
    %c0_i32_0 = arith.constant 0 : i32
    %c0_i32_1 = arith.constant 0 : i32
    return %c0_i32, %c0_i32_0 : i32, i32
  }
  func.func @transform_9(%arg0: i32) -> (i32, i32) {
    %c0_i32 = arith.constant 0 : i32
    %c0_i32_0 = arith.constant 0 : i32
    return %arg0, %c0_i32 : i32, i32
  }
}

</mosaic_0001>

<llo_original>
// kernel: tpu_custom_call.1
$region0: #{tpu_custom_call.1}
  #allocation0 [shape = 'u32[]', space=smem, size = 0x4, offset = 0x4, fixed_abs, tag = 'smem constant byte address 0x4 - core index']
  #allocation1 [shape = 'u32[144,128]{1,0:T(1,128)}', space=vmem, size = 0x12000, scoped, tag = 'internal scratch']
  %s0 = inlined_call_operand.hbm [shape: bf16[64,4], index: 0, kind: input, shape index: {}]
  %s1 = inlined_call_operand.hbm [shape: bf16[4,32], index: 1, kind: input, shape index: {}]
  %s2 = inlined_call_operand.hbm [shape: f32[1,32], index: 2, kind: input, shape index: {}]
  %s3 = inlined_call_operand.hbm [shape: bf16[32,64], index: 3, kind: input, shape index: {}]
  %s4 = inlined_call_operand.hbm [shape: f32[1,64], index: 4, kind: input, shape index: {}]
  %s5 = inlined_call_operand.hbm [shape: bf16[64,16], index: 5, kind: input, shape index: {}]
  %s6 = inlined_call_operand.hbm [shape: f32[1,16], index: 6, kind: input, shape index: {}]
  %s7 = inlined_call_operand.hbm [shape: bf16[16,16], index: 7, kind: input, shape index: {}]
  %s8 = inlined_call_operand.hbm [shape: f32[1,16], index: 8, kind: input, shape index: {}]
  %s9 = inlined_call_operand.hbm [shape: f32[8,16], index: 9, kind: output, shape index: {}]
  %s10 = sld [smem:[#allocation0]]
  $region82: #{tpu_custom_call.1} parent=0
    _
  %s12 = ssub.s32 1, %s10
  %s13 = scalar_select 0, %s12, %s10
  $region1: #{tpu_custom_call.1} parent=0
    #allocation2 [shape = 'u8[16384]{0}', space=vmem, size = 0x4000, scoped, tag = 'input window, operand 0, single buffered']
    #allocation3 [shape = 's32[1]{0}', space=sflag, size = 0x4, scoped, tag = 'scoped memory for tpu_custom_call.1']
    #allocation4 [shape = 's32[1]{0}', space=sflag, size = 0x4, scoped, tag = 'scoped memory for tpu_custom_call.1']
    #allocation5 [shape = 'u8[1024]{0}', space=vmem, size = 0x400, scoped, tag = 'input window, operand 1, single buffered']
    #allocation6 [shape = 's32[1]{0}', space=sflag, size = 0x4, scoped, tag = 'scoped memory for tpu_custom_call.1']
    #allocation7 [shape = 'u8[512]{0}', space=vmem, size = 0x400, scoped, tag = 'input window, operand 2, single buffered']
    #allocation8 [shape = 'u8[8192]{0}', space=vmem, size = 0x2000, scoped, tag = 'input window, operand 3, single buffered']
    #allocation9 [shape = 's32[1]{0}', space=sflag, size = 0x4, scoped, tag = 'scoped memory for tpu_custom_call.1']
    #allocation10 [shape = 'u8[512]{0}', space=vmem, size = 0x400, scoped, tag = 'input window, operand 4, single buffered']
    #allocation11 [shape = 'u8[16384]{0}', space=vmem, size = 0x4000, scoped, tag = 'input window, operand 5, single buffered']
    #allocation12 [shape = 's32[1]{0}', space=sflag, size = 0x4, scoped, tag = 'scoped memory for tpu_custom_call.1']
    #allocation13 [shape = 'u8[512]{0}', space=vmem, size = 0x400, scoped, tag = 'input window, operand 6, single buffered']
    #allocation14 [shape = 'u8[4096]{0}', space=vmem, size = 0x1000, scoped, tag = 'input window, operand 7, single buffered']
    #allocation15 [shape = 's32[1]{0}', space=sflag, size = 0x4, scoped, tag = 'scoped memory for tpu_custom_call.1']
    #allocation16 [shape = 'u8[512]{0}', space=vmem, size = 0x400, scoped, tag = 'input window, operand 8, single buffered']
    #allocation17 [shape = 'u8[4096]{0}', space=vmem, size = 0x1000, scoped, tag = 'output window, operand 0, single buffered']
    %14 = vsyncpa [#allocation3], 0
    %15 = vsyncpa [#allocation6], 0
    %16 = vsyncpa [#allocation9], 0
    %17 = vsyncpa [#allocation12], 0
    %18 = vsyncpa [#allocation15], 0
    %19 = vsyncpa [#allocation4], 0
    // Predicated region
    $region2: #{tpu_custom_call.1} parent=1 // pred_check
      _
    $region3: #{tpu_custom_call.1} parent=1 // pred_check_branch
      %21 = sbr.rel (0) target = $region5
    $region4: #{tpu_custom_call.1} parent=1 // pred_region
      %s23 = ssub.s32 512, 512
      %24 = vsyncadd [#allocation3], %s23
      %s25 = sshll.u32 [#allocation2], 4
      %s26 = int_to_ptr.vmem [resolvable:$true] %s25
      %31 = dma.hbm_to_vmem [thread:$0]  %s0, 512, %s26, [#allocation3], 64, 64, 4
    $region5: #{tpu_custom_call.1} parent=1 // pred_fallthru
      _
    // Predicated region
    $region6: #{tpu_custom_call.1} parent=1 // pred_check
      _
    $region7: #{tpu_custom_call.1} parent=1 // pred_check_branch
      %33 = sbr.rel (0) target = $region9
    $region8: #{tpu_custom_call.1} parent=1 // pred_region
      %s35 = ssub.s32 32, 32
      %36 = vsyncadd [#allocation6], %s35
      %s38 = sshll.u32 [#allocation5], 4
      %s39 = int_to_ptr.vmem [resolvable:$true] %s38
      %41 = dma.hbm_to_vmem [thread:$0]  %s1, 32, %s39, [#allocation6]
    $region9: #{tpu_custom_call.1} parent=1 // pred_fallthru
      _
    // Predicated region
    $region10: #{tpu_custom_call.1} parent=1 // pred_check
      _
    $region11: #{tpu_custom_call.1} parent=1 // pred_check_branch
      %43 = sbr.rel (0) target = $region13
    $region12: #{tpu_custom_call.1} parent=1 // pred_region
      %s45 = ssub.s32 16, 16
      %46 = vsyncadd [#allocation6], %s45
      %s48 = sshll.u32 [#allocation7], 4
      %s49 = int_to_ptr.vmem [resolvable:$true] %s48
      %51 = dma.hbm_to_vmem [thread:$0]  %s2, 16, %s49, [#allocation6]
    $region13: #{tpu_custom_call.1} parent=1 // pred_fallthru
      _
    // Predicated region
    $region14: #{tpu_custom_call.1} parent=1 // pred_check
      _
    $region15: #{tpu_custom_call.1} parent=1 // pred_check_branch
      %53 = sbr.rel (0) target = $region17
    $region16: #{tpu_custom_call.1} parent=1 // pred_region
      %s55 = ssub.s32 256, 256
      %56 = vsyncadd [#allocation9], %s55
      %s57 = sshll.u32 [#allocation8], 4
      %s58 = int_to_ptr.vmem [resolvable:$true] %s57
      %63 = dma.hbm_to_vmem [thread:$0]  %s3, 256, %s58, [#allocation9], 64, 64, 4
    $region17: #{tpu_custom_call.1} parent=1 // pred_fallthru
      _
    // Predicated region
    $region18: #{tpu_custom_call.1} parent=1 // pred_check
      _
    $region19: #{tpu_custom_call.1} parent=1 // pred_check_branch
      %65 = sbr.rel (0) target = $region21
    $region20: #{tpu_custom_call.1} parent=1 // pred_region
      %s67 = ssub.s32 16, 16
      %68 = vsyncadd [#allocation9], %s67
      %s70 = sshll.u32 [#allocation10], 4
      %s71 = int_to_ptr.vmem [resolvable:$true] %s70
      %73 = dma.hbm_to_vmem [thread:$0]  %s4, 16, %s71, [#allocation9]
    $region21: #{tpu_custom_call.1} parent=1 // pred_fallthru
      _
    // Predicated region
    $region22: #{tpu_custom_call.1} parent=1 // pred_check
      _
    $region23: #{tpu_custom_call.1} parent=1 // pred_check_branch
      %75 = sbr.rel (0) target = $region25
    $region24: #{tpu_custom_call.1} parent=1 // pred_region
      %s77 = ssub.s32 512, 512
      %78 = vsyncadd [#allocation12], %s77
      %s79 = sshll.u32 [#allocation11], 4
      %s80 = int_to_ptr.vmem [resolvable:$true] %s79
      %85 = dma.hbm_to_vmem [thread:$0]  %s5, 512, %s80, [#allocation12], 64, 64, 4
    $region25: #{tpu_custom_call.1} parent=1 // pred_fallthru
      _
    // Predicated region
    $region26: #{tpu_custom_call.1} parent=1 // pred_check
      _
    $region27: #{tpu_custom_call.1} parent=1 // pred_check_branch
      %87 = sbr.rel (0) target = $region29
    $region28: #{tpu_custom_call.1} parent=1 // pred_region
      %s89 = ssub.s32 16, 16
      %90 = vsyncadd [#allocation12], %s89
      %s92 = sshll.u32 [#allocation13], 4
      %s93 = int_to_ptr.vmem [resolvable:$true] %s92
      %95 = dma.hbm_to_vmem [thread:$0]  %s6, 16, %s93, [#allocation12]
    $region29: #{tpu_custom_call.1} parent=1 // pred_fallthru
      _
    // Predicated region
    $region30: #{tpu_custom_call.1} parent=1 // pred_check
      _
    $region31: #{tpu_custom_call.1} parent=1 // pred_check_branch
      %97 = sbr.rel (0) target = $region33
    $region32: #{tpu_custom_call.1} parent=1 // pred_region
      %s99 = ssub.s32 128, 128
      %100 = vsyncadd [#allocation15], %s99
      %s101 = sshll.u32 [#allocation14], 4
      %s102 = int_to_ptr.vmem [resolvable:$true] %s101
      %107 = dma.hbm_to_vmem [thread:$0]  %s7, 128, %s102, [#allocation15], 64, 64, 4
    $region33: #{tpu_custom_call.1} parent=1 // pred_fallthru
      _
    // Predicated region
    $region34: #{tpu_custom_call.1} parent=1 // pred_check
      _
    $region35: #{tpu_custom_call.1} parent=1 // pred_check_branch
      %109 = sbr.rel (0) target = $region37
    $region36: #{tpu_custom_call.1} parent=1 // pred_region
      %s111 = ssub.s32 16, 16
      %112 = vsyncadd [#allocation15], %s111
      %s114 = sshll.u32 [#allocation16], 4
      %s115 = int_to_ptr.vmem [resolvable:$true] %s114
      %117 = dma.hbm_to_vmem [thread:$0]  %s8, 16, %s115, [#allocation15]
    $region37: #{tpu_custom_call.1} parent=1 // pred_fallthru
      _
    // Predicated region
    $region38: #{tpu_custom_call.1} parent=1 // pred_check
      _
    $region39: #{tpu_custom_call.1} parent=1 // pred_check_branch
      %119 = sbr.rel (0) target = $region41
    $region40: #{tpu_custom_call.1} parent=1 // pred_region
      %120 = dma.done [#allocation3], 512
    $region41: #{tpu_custom_call.1} parent=1 // pred_fallthru
      _
    // Predicated region
    $region42: #{tpu_custom_call.1} parent=1 // pred_check
      _
    $region43: #{tpu_custom_call.1} parent=1 // pred_check_branch
      %122 = sbr.rel (0) target = $region45
    $region44: #{tpu_custom_call.1} parent=1 // pred_region
      %123 = dma.done [#allocation6], 32
    $region45: #{tpu_custom_call.1} parent=1 // pred_fallthru
      _
    // Predicated region
    $region46: #{tpu_custom_call.1} parent=1 // pred_check
      _
    $region47: #{tpu_custom_call.1} parent=1 // pred_check_branch
      %125 = sbr.rel (0) target = $region49
    $region48: #{tpu_custom_call.1} parent=1 // pred_region
      %126 = dma.done [#allocation6], 16
    $region49: #{tpu_custom_call.1} parent=1 // pred_fallthru
      _
    // Predicated region
    $region50: #{tpu_custom_call.1} parent=1 // pred_check
      _
    $region51: #{tpu_custom_call.1} parent=1 // pred_check_branch
      %128 = sbr.rel (0) target = $region53
    $region52: #{tpu_custom_call.1} parent=1 // pred_region
      %129 = dma.done [#allocation9], 256
    $region53: #{tpu_custom_call.1} parent=1 // pred_fallthru
      _
    // Predicated region
    $region54: #{tpu_custom_call.1} parent=1 // pred_check
      _
    $region55: #{tpu_custom_call.1} parent=1 // pred_check_branch
      %131 = sbr.rel (0) target = $region57
    $region56: #{tpu_custom_call.1} parent=1 // pred_region
      %132 = dma.done [#allocation9], 16
    $region57: #{tpu_custom_call.1} parent=1 // pred_fallthru
      _
    // Predicated region
    $region58: #{tpu_custom_call.1} parent=1 // pred_check
      _
    $region59: #{tpu_custom_call.1} parent=1 // pred_check_branch
      %134 = sbr.rel (0) target = $region61
    $region60: #{tpu_custom_call.1} parent=1 // pred_region
      %135 = dma.done [#allocation12], 512
    $region61: #{tpu_custom_call.1} parent=1 // pred_fallthru
      _
    // Predicated region
    $region62: #{tpu_custom_call.1} parent=1 // pred_check
      _
    $region63: #{tpu_custom_call.1} parent=1 // pred_check_branch
      %137 = sbr.rel (0) target = $region65
    $region64: #{tpu_custom_call.1} parent=1 // pred_region
      %138 = dma.done [#allocation12], 16
    $region65: #{tpu_custom_call.1} parent=1 // pred_fallthru
      _
    // Predicated region
    $region66: #{tpu_custom_call.1} parent=1 // pred_check
      _
    $region67: #{tpu_custom_call.1} parent=1 // pred_check_branch
      %140 = sbr.rel (0) target = $region69
    $region68: #{tpu_custom_call.1} parent=1 // pred_region
      %141 = dma.done [#allocation15], 128
    $region69: #{tpu_custom_call.1} parent=1 // pred_fallthru
      _
    // Predicated region
    $region70: #{tpu_custom_call.1} parent=1 // pred_check
      _
    $region71: #{tpu_custom_call.1} parent=1 // pred_check_branch
      %143 = sbr.rel (0) target = $region73
    $region72: #{tpu_custom_call.1} parent=1 // pred_region
      %144 = dma.done [#allocation15], 16
    $region73: #{tpu_custom_call.1} parent=1 // pred_fallthru
      _
    %v146 = vld [vmem:[#allocation2] sm:$0xf]
    %v147 = vld [vmem:[#allocation2 + $0x4] sm:$0xf]
    %v148 = vld [vmem:[#allocation2 + $0x8] sm:$0xf]
    %v149 = vld [vmem:[#allocation2 + $0xc] sm:$0xf]
    %v150 = vld [vmem:[#allocation2 + $0x10] sm:$0xf]
    %v151 = vld [vmem:[#allocation2 + $0x14] sm:$0xf]
    %v152 = vld [vmem:[#allocation2 + $0x18] sm:$0xf]
    %v153 = vld [vmem:[#allocation2 + $0x1c] sm:$0xf]
    %v154 = vld [vmem:[#allocation5] sm:$0x3]
    %v155 = vld [vmem:[#allocation7] sm:$0x1]
    %v157 = vlaneseq
    %v158 = vshrl.u32 %v157, 7
    %v159 = vsub.s32 0, %v158
    %v160 = vrot.slane %v155, %v159
    %v170 = vunpack.c.l.b16 %v146
    %v171 = vunpack.c.l.b16 %v147
    %v172 = vunpack.c.l.b16 %v148
    %v173 = vunpack.c.l.b16 %v149
    %v174 = vunpack.c.l.b16 %v150
    %v175 = vunpack.c.l.b16 %v151
    %v176 = vunpack.c.l.b16 %v152
    %v177 = vunpack.c.l.b16 %v153
    %v178 = vpack.c.b16 %v171, %v170
    %v179 = vpack.c.b16 %v173, %v172
    %v180 = vpack.c.b16 %v175, %v174
    %v181 = vpack.c.b16 %v177, %v176
    %vm182 = vcmask 31744
    %v184 = vsel %vm182, %v178, 0
    %v187 = vsel %vm182, %v179, 0
    %v190 = vsel %vm182, %v180, 0
    %v193 = vsel %vm182, %v181, 0
    %vm195 = vcmask 1041408
    %v197 = vsel %vm195, %v154, 0
    %199 = vmatprep.subr.bf16.mxu0 0
    %200 = vmatpush1.bf16.msra.mxu0 %v197
    %201 = vmatprep.subr.bf16.mxu0 0
    %202 = vmatpush1.bf16.msra.mxu0 0
    %203 = vmatprep.subr.bf16.mxu0 0
    %204 = vmatpush1.bf16.msra.mxu0 0
    %205 = vmatprep.subr.bf16.mxu0 0
    %206 = vmatpush1.bf16.msra.mxu0 0
    %207 = vmatprep.subr.bf16.mxu0 0
    %208 = vmatpush1.bf16.msra.mxu0 0
    %209 = vmatprep.subr.bf16.mxu0 0
    %210 = vmatpush1.bf16.msra.mxu0 0
    %211 = vmatprep.subr.bf16.mxu0 0
    %212 = vmatpush1.bf16.msra.mxu0 0
    %213 = vmatprep.subr.bf16.mxu0 0
    %214 = vmatpush1.bf16.msra.mxu0 0
    %215 = vmatprep.subr.bf16.mxu0 0
    %216 = vmatpush1.bf16.msra.mxu0 0
    %217 = vmatprep.subr.bf16.mxu0 0
    %218 = vmatpush1.bf16.msra.mxu0 0
    %219 = vmatprep.subr.bf16.mxu0 0
    %220 = vmatpush1.bf16.msra.mxu0 0
    %221 = vmatprep.subr.bf16.mxu0 0
    %222 = vmatpush1.bf16.msra.mxu0 0
    %223 = vmatprep.subr.bf16.mxu0 0
    %224 = vmatpush1.bf16.msra.mxu0 0
    %225 = vmatprep.subr.bf16.mxu0 0
    %226 = vmatpush1.bf16.msra.mxu0 0
    %227 = vmatprep.subr.bf16.mxu0 0
    %228 = vmatpush1.bf16.msra.mxu0 0
    %229 = vmatprep.subr.bf16.mxu0 0
    %230 = vmatpush1.bf16.msra.mxu0 0
    %231 = vmatprep.mubr.bf16.mxu0 0
    %232 = vmatmul.mubr.bf16.gmra.mrb[0].mxu0 %v184
    %v233 = vpop.f32.mrb[0].mxu0
    %v234 = vadd.f32 %v160, %v233
    %v235 = vpop.f32.mrb[0].mxu0
    %v236 = vpop.f32.mrb[0].mxu0
    %v237 = vadd.f32 %v160, %v236
    %v238 = vpop.f32.mrb[0].mxu0
    %239 = vmatprep.mubr.bf16.mxu0 0
    %240 = vmatmul.mubr.bf16.gmra.mrb[0].mxu0 %v187
    %v241 = vpop.f32.mrb[0].mxu0
    %v242 = vadd.f32 %v160, %v241
    %v243 = vpop.f32.mrb[0].mxu0
    %v244 = vpop.f32.mrb[0].mxu0
    %v245 = vadd.f32 %v160, %v244
    %v246 = vpop.f32.mrb[0].mxu0
    %247 = vmatprep.mubr.bf16.mxu0 0
    %248 = vmatmul.mubr.bf16.gmra.mrb[0].mxu0 %v190
    %v249 = vpop.f32.mrb[0].mxu0
    %v250 = vadd.f32 %v160, %v249
    %v251 = vpop.f32.mrb[0].mxu0
    %v252 = vpop.f32.mrb[0].mxu0
    %v253 = vadd.f32 %v160, %v252
    %v254 = vpop.f32.mrb[0].mxu0
    %255 = vmatprep.mubr.bf16.mxu0 0
    %256 = vmatmul.mubr.bf16.gmra.mrb[0].mxu0 %v193
    %v257 = vpop.f32.mrb[0].mxu0
    %v258 = vadd.f32 %v160, %v257
    %v259 = vpop.f32.mrb[0].mxu0
    %v260 = vpop.f32.mrb[0].mxu0
    %v261 = vadd.f32 %v160, %v260
    %v262 = vpop.f32.mrb[0].mxu0
    %263 = vdwg.mxu0
    %v264 = vmax.f32 %v234, 0.0
    %v265 = vmax.f32 %v237, 0.0
    %v266 = vmax.f32 %v242, 0.0
    %v267 = vmax.f32 %v245, 0.0
    %v268 = vmax.f32 %v250, 0.0
    %v269 = vmax.f32 %v253, 0.0
    %v270 = vmax.f32 %v258, 0.0
    %v271 = vmax.f32 %v261, 0.0
    %v272 = vpack.c.bf16 %v265, %v264
    %v273 = vpack.c.bf16 %v267, %v266
    %v274 = vpack.c.bf16 %v269, %v268
    %v275 = vpack.c.bf16 %v271, %v270
    %v276 = vld [vmem:[#allocation8] sm:$0xf]
    %v277 = vld [vmem:[#allocation8 + $0x4] sm:$0xf]
    %v278 = vld [vmem:[#allocation8 + $0x8] sm:$0xf]
    %v279 = vld [vmem:[#allocation8 + $0xc] sm:$0xf]
    %v280 = vld [vmem:[#allocation10] sm:$0x1]
    %v282 = vlaneseq
    %v283 = vshrl.u32 %v282, 7
    %v284 = vsub.s32 0, %v283
    %v285 = vrot.slane %v280, %v284
    %v291 = vunpack.c.l.b16 %v276
    %v292 = vunpack.c.l.b16 %v277
    %v293 = vunpack.c.l.b16 %v278
    %v294 = vunpack.c.l.b16 %v279
    %v295 = vpack.c.b16 %v292, %v291
    %v296 = vpack.c.b16 %v294, %v293
    %vm299 = vcmask 261120
    %v301 = vsel %vm299, %v272, 0
    %v304 = vsel %vm299, %v273, 0
    %v307 = vsel %vm299, %v274, 0
    %v310 = vsel %vm299, %v275, 0
    %312 = vmatprep.subr.bf16.mxu0 0
    %313 = vmatpush1.bf16.msra.mxu0 %v295
    %314 = vmatprep.subr.bf16.mxu0 0
    %315 = vmatpush1.bf16.msra.mxu0 %v296
    %316 = vmatprep.subr.bf16.mxu0 0
    %317 = vmatpush1.bf16.msra.mxu0 0
    %318 = vmatprep.subr.bf16.mxu0 0
    %319 = vmatpush1.bf16.msra.mxu0 0
    %320 = vmatprep.subr.bf16.mxu0 0
    %321 = vmatpush1.bf16.msra.mxu0 0
    %322 = vmatprep.subr.bf16.mxu0 0
    %323 = vmatpush1.bf16.msra.mxu0 0
    %324 = vmatprep.subr.bf16.mxu0 0
    %325 = vmatpush1.bf16.msra.mxu0 0
    %326 = vmatprep.subr.bf16.mxu0 0
    %327 = vmatpush1.bf16.msra.mxu0 0
    %328 = vmatprep.subr.bf16.mxu0 0
    %329 = vmatpush1.bf16.msra.mxu0 0
    %330 = vmatprep.subr.bf16.mxu0 0
    %331 = vmatpush1.bf16.msra.mxu0 0
    %332 = vmatprep.subr.bf16.mxu0 0
    %333 = vmatpush1.bf16.msra.mxu0 0
    %334 = vmatprep.subr.bf16.mxu0 0
    %335 = vmatpush1.bf16.msra.mxu0 0
    %336 = vmatprep.subr.bf16.mxu0 0
    %337 = vmatpush1.bf16.msra.mxu0 0
    %338 = vmatprep.subr.bf16.mxu0 0
    %339 = vmatpush1.bf16.msra.mxu0 0
    %340 = vmatprep.subr.bf16.mxu0 0
    %341 = vmatpush1.bf16.msra.mxu0 0
    %342 = vmatprep.subr.bf16.mxu0 0
    %343 = vmatpush1.bf16.msra.mxu0 0
    %344 = vmatprep.mubr.bf16.mxu0 0
    %345 = vmatmul.mubr.bf16.gmra.mrb[0].mxu0 %v301
    %v346 = vpop.f32.mrb[0].mxu0
    %v347 = vadd.f32 %v285, %v346
    %v348 = vpop.f32.mrb[0].mxu0
    %v349 = vpop.f32.mrb[0].mxu0
    %v350 = vadd.f32 %v285, %v349
    %v351 = vpop.f32.mrb[0].mxu0
    %352 = vmatprep.mubr.bf16.mxu0 0
    %353 = vmatmul.mubr.bf16.gmra.mrb[0].mxu0 %v304
    %v354 = vpop.f32.mrb[0].mxu0
    %v355 = vadd.f32 %v285, %v354
    %v356 = vpop.f32.mrb[0].mxu0
    %v357 = vpop.f32.mrb[0].mxu0
    %v358 = vadd.f32 %v285, %v357
    %v359 = vpop.f32.mrb[0].mxu0
    %360 = vmatprep.mubr.bf16.mxu0 0
    %361 = vmatmul.mubr.bf16.gmra.mrb[0].mxu0 %v307
    %v362 = vpop.f32.mrb[0].mxu0
    %v363 = vadd.f32 %v285, %v362
    %v364 = vpop.f32.mrb[0].mxu0
    %v365 = vpop.f32.mrb[0].mxu0
    %v366 = vadd.f32 %v285, %v365
    %v367 = vpop.f32.mrb[0].mxu0
    %368 = vmatprep.mubr.bf16.mxu0 0
    %369 = vmatmul.mubr.bf16.gmra.mrb[0].mxu0 %v310
    %v370 = vpop.f32.mrb[0].mxu0
    %v371 = vadd.f32 %v285, %v370
    %v372 = vpop.f32.mrb[0].mxu0
    %v373 = vpop.f32.mrb[0].mxu0
    %v374 = vadd.f32 %v285, %v373
    %v375 = vpop.f32.mrb[0].mxu0
    %376 = vdwg.mxu0
    %v377 = vmax.f32 %v347, 0.0
    %v378 = vmax.f32 %v350, 0.0
    %v379 = vmax.f32 %v355, 0.0
    %v380 = vmax.f32 %v358, 0.0
    %v381 = vmax.f32 %v363, 0.0
    %v382 = vmax.f32 %v366, 0.0
    %v383 = vmax.f32 %v371, 0.0
    %v384 = vmax.f32 %v374, 0.0
    %v385 = vpack.c.bf16 %v378, %v377
    %v386 = vpack.c.bf16 %v380, %v379
    %v387 = vpack.c.bf16 %v382, %v381
    %v388 = vpack.c.bf16 %v384, %v383
    %v389 = vld [vmem:[#allocation11] sm:$0xf]
    %v390 = vld [vmem:[#allocation11 + $0x4] sm:$0xf]
    %v391 = vld [vmem:[#allocation11 + $0x8] sm:$0xf]
    %v392 = vld [vmem:[#allocation11 + $0xc] sm:$0xf]
    %v393 = vld [vmem:[#allocation11 + $0x10] sm:$0xf]
    %v394 = vld [vmem:[#allocation11 + $0x14] sm:$0xf]
    %v395 = vld [vmem:[#allocation11 + $0x18] sm:$0xf]
    %v396 = vld [vmem:[#allocation11 + $0x1c] sm:$0xf]
    %v397 = vld [vmem:[#allocation13] sm:$0x1]
    %v399 = vlaneseq
    %v400 = vshrl.u32 %v399, 7
    %v401 = vsub.s32 0, %v400
    %v402 = vrot.slane %v397, %v401
    %v412 = vunpack.c.l.b16 %v389
    %v413 = vunpack.c.l.b16 %v390
    %v414 = vunpack.c.l.b16 %v391
    %v415 = vunpack.c.l.b16 %v392
    %v416 = vunpack.c.l.b16 %v393
    %v417 = vunpack.c.l.b16 %v394
    %v418 = vunpack.c.l.b16 %v395
    %v419 = vunpack.c.l.b16 %v396
    %v420 = vpack.c.b16 %v413, %v412
    %v421 = vpack.c.b16 %v415, %v414
    %v422 = vpack.c.b16 %v417, %v416
    %v423 = vpack.c.b16 %v419, %v418
    %vm428 = vcmask 523264
    %v430 = vsel %vm428, %v385, 0
    %v433 = vsel %vm428, %v386, 0
    %v436 = vsel %vm428, %v387, 0
    %v439 = vsel %vm428, %v388, 0
    %441 = vmatprep.subr.bf16.mxu0 0
    %442 = vmatpush1.bf16.msra.mxu0 %v420
    %443 = vmatprep.subr.bf16.mxu0 0
    %444 = vmatpush1.bf16.msra.mxu0 %v421
    %445 = vmatprep.subr.bf16.mxu0 0
    %446 = vmatpush1.bf16.msra.mxu0 %v422
    %447 = vmatprep.subr.bf16.mxu0 0
    %448 = vmatpush1.bf16.msra.mxu0 %v423
    %449 = vmatprep.subr.bf16.mxu0 0
    %450 = vmatpush1.bf16.msra.mxu0 0
    %451 = vmatprep.subr.bf16.mxu0 0
    %452 = vmatpush1.bf16.msra.mxu0 0
    %453 = vmatprep.subr.bf16.mxu0 0
    %454 = vmatpush1.bf16.msra.mxu0 0
    %455 = vmatprep.subr.bf16.mxu0 0
    %456 = vmatpush1.bf16.msra.mxu0 0
    %457 = vmatprep.subr.bf16.mxu0 0
    %458 = vmatpush1.bf16.msra.mxu0 0
    %459 = vmatprep.subr.bf16.mxu0 0
    %460 = vmatpush1.bf16.msra.mxu0 0
    %461 = vmatprep.subr.bf16.mxu0 0
    %462 = vmatpush1.bf16.msra.mxu0 0
    %463 = vmatprep.subr.bf16.mxu0 0
    %464 = vmatpush1.bf16.msra.mxu0 0
    %465 = vmatprep.subr.bf16.mxu0 0
    %466 = vmatpush1.bf16.msra.mxu0 0
    %467 = vmatprep.subr.bf16.mxu0 0
    %468 = vmatpush1.bf16.msra.mxu0 0
    %469 = vmatprep.subr.bf16.mxu0 0
    %470 = vmatpush1.bf16.msra.mxu0 0
    %471 = vmatprep.subr.bf16.mxu0 0
    %472 = vmatpush1.bf16.msra.mxu0 0
    %473 = vmatprep.mubr.bf16.mxu0 0
    %474 = vmatmul.mubr.bf16.gmra.mrb[0].mxu0 %v430
    %v475 = vpop.f32.mrb[0].mxu0
    %v476 = vadd.f32 %v402, %v475
    %v477 = vpop.f32.mrb[0].mxu0
    %v478 = vpop.f32.mrb[0].mxu0
    %v479 = vadd.f32 %v402, %v478
    %v480 = vpop.f32.mrb[0].mxu0
    %481 = vmatprep.mubr.bf16.mxu0 0
    %482 = vmatmul.mubr.bf16.gmra.mrb[0].mxu0 %v433
    %v483 = vpop.f32.mrb[0].mxu0
    %v484 = vadd.f32 %v402, %v483
    %v485 = vpop.f32.mrb[0].mxu0
    %v486 = vpop.f32.mrb[0].mxu0
    %v487 = vadd.f32 %v402, %v486
    %v488 = vpop.f32.mrb[0].mxu0
    %489 = vmatprep.mubr.bf16.mxu0 0
    %490 = vmatmul.mubr.bf16.gmra.mrb[0].mxu0 %v436
    %v491 = vpop.f32.mrb[0].mxu0
    %v492 = vadd.f32 %v402, %v491
    %v493 = vpop.f32.mrb[0].mxu0
    %v494 = vpop.f32.mrb[0].mxu0
    %v495 = vadd.f32 %v402, %v494
    %v496 = vpop.f32.mrb[0].mxu0
    %497 = vmatprep.mubr.bf16.mxu0 0
    %498 = vmatmul.mubr.bf16.gmra.mrb[0].mxu0 %v439
    %v499 = vpop.f32.mrb[0].mxu0
    %v500 = vadd.f32 %v402, %v499
    %v501 = vpop.f32.mrb[0].mxu0
    %v502 = vpop.f32.mrb[0].mxu0
    %v503 = vadd.f32 %v402, %v502
    %v504 = vpop.f32.mrb[0].mxu0
    %505 = vdwg.mxu0
    %vm506 = vcmask 130048
    %v507 = vsel %vm506, %v476, 0.0
    %v508 = vrot.slane %v507, 4
    %v509 = vadd.f32 %v507, %v508
    %v510 = vrot.slane %v509, 2
    %v511 = vadd.f32 %v509, %v510
    %v512 = vrot.slane %v511, 1
    %v513 = vadd.f32 %v511, %v512
    %v514 = vsel %vm506, %v479, 0.0
    %v515 = vrot.slane %v514, 4
    %v516 = vadd.f32 %v514, %v515
    %v517 = vrot.slane %v516, 2
    %v518 = vadd.f32 %v516, %v517
    %v519 = vrot.slane %v518, 1
    %v520 = vadd.f32 %v518, %v519
    %v521 = vsel %vm506, %v484, 0.0
    %v522 = vrot.slane %v521, 4
    %v523 = vadd.f32 %v521, %v522
    %v524 = vrot.slane %v523, 2
    %v525 = vadd.f32 %v523, %v524
    %v526 = vrot.slane %v525, 1
    %v527 = vadd.f32 %v525, %v526
    %v528 = vsel %vm506, %v487, 0.0
    %v529 = vrot.slane %v528, 4
    %v530 = vadd.f32 %v528, %v529
    %v531 = vrot.slane %v530, 2
    %v532 = vadd.f32 %v530, %v531
    %v533 = vrot.slane %v532, 1
    %v534 = vadd.f32 %v532, %v533
    %v535 = vsel %vm506, %v492, 0.0
    %v536 = vrot.slane %v535, 4
    %v537 = vadd.f32 %v535, %v536
    %v538 = vrot.slane %v537, 2
    %v539 = vadd.f32 %v537, %v538
    %v540 = vrot.slane %v539, 1
    %v541 = vadd.f32 %v539, %v540
    %v542 = vsel %vm506, %v495, 0.0
    %v543 = vrot.slane %v542, 4
    %v544 = vadd.f32 %v542, %v543
    %v545 = vrot.slane %v544, 2
    %v546 = vadd.f32 %v544, %v545
    %v547 = vrot.slane %v546, 1
    %v548 = vadd.f32 %v546, %v547
    %v549 = vsel %vm506, %v500, 0.0
    %v550 = vrot.slane %v549, 4
    %v551 = vadd.f32 %v549, %v550
    %v552 = vrot.slane %v551, 2
    %v553 = vadd.f32 %v551, %v552
    %v554 = vrot.slane %v553, 1
    %v555 = vadd.f32 %v553, %v554
    %v556 = vsel %vm506, %v503, 0.0
    %v557 = vrot.slane %v556, 4
    %v558 = vadd.f32 %v556, %v557
    %v559 = vrot.slane %v558, 2
    %v560 = vadd.f32 %v558, %v559
    %v561 = vrot.slane %v560, 1
    %v562 = vadd.f32 %v560, %v561
    %v563 = vpack.c.bf16 %v513, %v513
    %v564 = vpack.c.bf16 %v520, %v520
    %v565 = vpack.c.bf16 %v527, %v527
    %v566 = vpack.c.bf16 %v534, %v534
    %v567 = vpack.c.bf16 %v541, %v541
    %v568 = vpack.c.bf16 %v548, %v548
    %v569 = vpack.c.bf16 %v555, %v555
    %v570 = vpack.c.bf16 %v562, %v562
    %v571 = vld [vmem:[#allocation14] sm:$0xf]
    %v572 = vld [vmem:[#allocation14 + $0x4] sm:$0xf]
    %v573 = vld [vmem:[#allocation16] sm:$0x1]
    %v575 = vlaneseq
    %v576 = vshrl.u32 %v575, 7
    %v577 = vsub.s32 0, %v576
    %v578 = vrot.slane %v573, %v577
    %v588 = vunpack.c.l.b16 %v563
    %v589 = vunpack.c.l.b16 %v564
    %v590 = vunpack.c.l.b16 %v565
    %v591 = vunpack.c.l.b16 %v566
    %v592 = vunpack.c.l.b16 %v567
    %v593 = vunpack.c.l.b16 %v568
    %v594 = vunpack.c.l.b16 %v569
    %v595 = vunpack.c.l.b16 %v570
    %vm596 = vcmask 1041409
    %v597 = vsel %vm596, %v589, %v588
    %vm598 = vcmask 1042434
    %v599 = vsel %vm598, %v590, %v597
    %vm600 = vcmask 1043459
    %v601 = vsel %vm600, %v591, %v599
    %vm602 = vcmask 1044484
    %v603 = vsel %vm602, %v592, %v601
    %vm604 = vcmask 1045509
    %v605 = vsel %vm604, %v593, %v603
    %vm606 = vcmask 1046534
    %v607 = vsel %vm606, %v594, %v605
    %vm608 = vcmask 1047559
    %v609 = vsel %vm608, %v595, %v607
    %v610 = vpack.c.b16 %v609, %v609
    %v613 = vunpack.c.l.b16 %v571
    %v614 = vunpack.c.l.b16 %v572
    %v615 = vpack.c.b16 %v614, %v613
    %v618 = vsel %vm506, %v610, 0
    %620 = vmatprep.subr.bf16.mxu0 0
    %621 = vmatpush1.bf16.msra.mxu0 %v615
    %622 = vmatprep.subr.bf16.mxu0 0
    %623 = vmatpush1.bf16.msra.mxu0 0
    %624 = vmatprep.subr.bf16.mxu0 0
    %625 = vmatpush1.bf16.msra.mxu0 0
    %626 = vmatprep.subr.bf16.mxu0 0
    %627 = vmatpush1.bf16.msra.mxu0 0
    %628 = vmatprep.subr.bf16.mxu0 0
    %629 = vmatpush1.bf16.msra.mxu0 0
    %630 = vmatprep.subr.bf16.mxu0 0
    %631 = vmatpush1.bf16.msra.mxu0 0
    %632 = vmatprep.subr.bf16.mxu0 0
    %633 = vmatpush1.bf16.msra.mxu0 0
    %634 = vmatprep.subr.bf16.mxu0 0
    %635 = vmatpush1.bf16.msra.mxu0 0
    %636 = vmatprep.subr.bf16.mxu0 0
    %637 = vmatpush1.bf16.msra.mxu0 0
    %638 = vmatprep.subr.bf16.mxu0 0
    %639 = vmatpush1.bf16.msra.mxu0 0
    %640 = vmatprep.subr.bf16.mxu0 0
    %641 = vmatpush1.bf16.msra.mxu0 0
    %642 = vmatprep.subr.bf16.mxu0 0
    %643 = vmatpush1.bf16.msra.mxu0 0
    %644 = vmatprep.subr.bf16.mxu0 0
    %645 = vmatpush1.bf16.msra.mxu0 0
    %646 = vmatprep.subr.bf16.mxu0 0
    %647 = vmatpush1.bf16.msra.mxu0 0
    %648 = vmatprep.subr.bf16.mxu0 0
    %649 = vmatpush1.bf16.msra.mxu0 0
    %650 = vmatprep.subr.bf16.mxu0 0
    %651 = vmatpush1.bf16.msra.mxu0 0
    %652 = vmatprep.mubr.bf16.mxu0 0
    %653 = vmatmul.mubr.bf16.gmra.mrb[0].mxu0 %v618
    %v654 = vpop.f32.mrb[0].mxu0
    %v655 = vadd.f32 %v578, %v654
    %v656 = vpop.f32.mrb[0].mxu0
    %v657 = vpop.f32.mrb[0].mxu0
    %v658 = vpop.f32.mrb[0].mxu0
    %659 = vdwg.mxu0
    %660 = vst.msk [vmem:[#allocation17] sm:$0xff] %vm506, %v655
    // Predicated region
    $region74: #{tpu_custom_call.1} parent=1 // pred_check
      _
    $region75: #{tpu_custom_call.1} parent=1 // pred_check_branch
      %662 = sbr.rel (0) target = $region77
    $region76: #{tpu_custom_call.1} parent=1 // pred_region
      %s664 = ssub.s32 128, 128
      %665 = vsyncadd [#allocation4], %s664
      %s667 = sshll.u32 [#allocation17], 4
      %s668 = int_to_ptr.vmem [resolvable:$true] %s667
      %670 = dma.vmem_to_hbm [thread:$0]  %s668, 128, %s9, [#allocation4]
    $region77: #{tpu_custom_call.1} parent=1 // pred_fallthru
      _
    // Predicated region
    $region78: #{tpu_custom_call.1} parent=1 // pred_check
      _
    $region79: #{tpu_custom_call.1} parent=1 // pred_check_branch
      %672 = sbr.rel (0) target = $region81
    $region80: #{tpu_custom_call.1} parent=1 // pred_region
      %673 = dma.done [#allocation4], 128
    $region81: #{tpu_custom_call.1} parent=1 // pred_fallthru
      _
    %674 = vsyncpa [#allocation3], 1
    %675 = vsyncpa [#allocation6], 1
    %676 = vsyncpa [#allocation9], 1
    %677 = vsyncpa [#allocation12], 1
    %678 = vsyncpa [#allocation15], 1
    %679 = vsyncpa [#allocation4], 1

</llo_original>
